<compile_context>
chip_gen: v6e
topology: v6e:2x2x1
jax: 0.10.0
libtpu: 0.0.40
codegen_flags: <defaults>
</compile_context>

<pallas_src>
import jax
import jax.numpy as jnp
from jax.experimental import pallas as pl
from jax.experimental.pallas import tpu as pltpu


def _round_up(x: int, m: int) -> int:
    return (x + m - 1) // m * m


def arp_injector_kernel(ids_smem, pids_smem, ids_ref, pparams_ref, table_hbm,
                        out_ref, sems):
    # ids_smem    : SMEM [N_pad]   int32   scalar-prefetched flat token ids (DMA addressing)
    # pids_smem   : SMEM [P]       int32   prompt token ids
    # ids_ref     : VMEM [tn, 1]   int32   this tile's token ids (vector compares)
    # pparams_ref : VMEM [P, D]            prompt parameters (resident across tiles)
    # table_hbm   : HBM  [V, D]            embedding table (never tiled into VMEM)
    # out_ref     : VMEM [tn, D]           output tile; DMA-gather destination
    # sems        : DMA semaphores [W]     rolling window of in-flight row copies
    i = pl.program_id(0)
    tn, D = out_ref.shape
    P = pparams_ref.shape[0]
    W = sems.shape[0]              # wrapper guarantees W <= tn
    base = i * tn

    def row_copy(t, slot):
        row = ids_smem[base + t]
        return pltpu.make_async_copy(
            table_hbm.at[pl.ds(row, 1), :],   # (1, D) row in HBM
            out_ref.at[pl.ds(t, 1), :],       # (1, D) destination row in VMEM
            sems.at[slot],
        )

    # Prime the DMA window.
    @pl.loop(0, W)
    def _prime(t):
        row_copy(t, t).start()

    # Rolling gather: wait row t, immediately refill its slot with row t + W.
    @pl.loop(0, tn)
    def _gather(t):
        slot = t % W
        row_copy(t, slot).wait()

        @pl.when(t + W < tn)
        def _():
            row_copy(t + W, slot).start()

    # Prompt injection: overwrite rows whose token id matches a prompt id.
    # Applied sequentially (later prompts win), matching the reference loop.
    ids = ids_ref[...]                                   # [tn, 1] int32
    hit = ids == pids_smem[0]
    for p in range(1, P):
        hit = hit | (ids == pids_smem[p])
    hit_count = jnp.sum(hit.astype(jnp.int32))

    @pl.when(hit_count > 0)
    def _inject():
        emb = out_ref[...]                               # [tn, D]
        for p in range(P):
            mask = ids == pids_smem[p]                   # [tn, 1]
            emb = jnp.where(mask, pparams_ref[p, :].reshape(1, D), emb)
        out_ref[...] = emb


def arp_injector(input_ids, emb_table, prompt_ids, prompt_params, *, tn=128):
    """Pallas implementation of ArpInjector.forward (ParameterDict path)."""
    B, S = input_ids.shape
    V, D = emb_table.shape
    P = int(prompt_params.shape[0])

    if P == 0:
        # Keep the kernel shape-static with a never-matching prompt id.
        prompt_ids = jnp.full((1,), -1, dtype=jnp.int32)
        prompt_params = jnp.zeros((1, D), dtype=emb_table.dtype)
        P = 1

    N = B * S
    # Token tile: multiple of 8 sublanes; shrink so small inputs still produce
    # >= 2 tiles (keeps both v7x TensorCores busy on the "parallel" axis).
    tn = max(8, min(tn, _round_up(pl.cdiv(N, 2), 8), _round_up(N, 8)))
    N_pad = _round_up(N, tn)
    W = min(16, tn)                 # in-flight row DMAs per tile

    ids_flat = jnp.pad(input_ids.reshape(N).astype(jnp.int32), (0, N_pad - N))
    ids_col = ids_flat.reshape(N_pad, 1)
    prompt_ids = prompt_ids.astype(jnp.int32)
    prompt_params = prompt_params.astype(emb_table.dtype)

    out = pl.pallas_call(
        arp_injector_kernel,
        out_shape=jax.ShapeDtypeStruct((N_pad, D), emb_table.dtype),
        grid_spec=pltpu.PrefetchScalarGridSpec(
            num_scalar_prefetch=2,                       # ids_flat, prompt_ids -> SMEM
            grid=(N_pad // tn,),
            in_specs=[
                pl.BlockSpec((tn, 1), lambda i, ids, pids: (i, 0)),  # ids tile (VMEM)
                pl.BlockSpec((P, D), lambda i, ids, pids: (0, 0)),   # prompt params (resident)
                pl.BlockSpec(memory_space=pl.ANY),                   # table stays in HBM
            ],
            out_specs=pl.BlockSpec((tn, D), lambda i, ids, pids: (i, 0)),
            scratch_shapes=[pltpu.SemaphoreType.DMA((W,))],
        ),
        compiler_params=pltpu.CompilerParams(
            dimension_semantics=("parallel",),
        ),
    )(ids_flat, prompt_ids, ids_col, prompt_params, emb_table)

    # Drop token padding, restore [B, S, D].
    return out[:N].reshape(B, S, D)


if __name__ == "__main__":
    key = jax.random.PRNGKey(0)
    k_emb, k_prm, k_ids = jax.random.split(key, 3)

    # Small synthetic shapes consistent with the module.
    B, S = 2, 8          # batch, sequence
    V, D = 32, 32        # vocab size, embedding_dim
    P = 3                # number of (non-mask) prompt tokens

    # reset_params with prompt_better_init=False -> normal(0, 1) prompt params;
    # embedder weights synthetic.
    emb_table = jax.random.normal(k_emb, (V, D), dtype=jnp.float32)
    prompt_params = jax.random.normal(k_prm, (P, D), dtype=jnp.float32)
    prompt_ids = jnp.array([5, 9, 13], dtype=jnp.int32)   # prompt_to_id values

    input_ids = jax.random.randint(k_ids, (B, S), 0, V, dtype=jnp.int32)
    # Ensure some prompt tokens actually appear in the input.
    input_ids = input_ids.at[0, 2].set(5).at[1, 4].set(9).at[0, 6].set(13)

    run = jax.jit(arp_injector)
    out = run(input_ids, emb_table, prompt_ids, prompt_params)
    out = jax.block_until_ready(out)

    # Pure-JAX reference of ArpInjector.forward (ParameterDict path).
    ref = emb_table[input_ids]                             # embedding lookup
    for p in range(P):
        mask = (input_ids == prompt_ids[p])[..., None]
        ref = jnp.where(mask, prompt_params[p], ref)

    assert out.shape == (B, S, D)
    assert jnp.allclose(out, ref, atol=1e-5, rtol=1e-5), "mismatch vs reference"
    print("KERNEL_OK")
</pallas_src>

<mosaic_0001>
module attributes {stable_mosaic.version = 11 : i64} {
  func.func @arp_injector_kernel(%arg0: i32, %arg1: memref<16xi32, #tpu.memory_space<smem>>, %arg2: memref<3xi32, #tpu.memory_space<smem>>, %arg3: memref<8x1xi32, #tpu.memory_space<vmem>>, %arg4: memref<3x32xf32, #tpu.memory_space<vmem>>, %arg5: memref<32x32xf32, #tpu.memory_space<any>>, %arg6: memref<8x32xf32, #tpu.memory_space<vmem>>, %arg7: memref<8x!tpu.dma_semaphore, #tpu.memory_space<semaphore_mem>>) attributes {dimension_semantics = [#tpu.dimension_semantics<parallel>], iteration_bounds = array<i64: 2>, scalar_prefetch = 2 : i64, scratch_operands = 1 : i64, tpu.core_type = #tpu.core_type<tc>, window_params = [{transform_indices = @transform_0, window_bounds = array<i64: 8, 1>}, {pipeline_mode = #tpu.pipeline_mode<synchronous>, transform_indices = @transform_1, window_bounds = array<i64: 3, 32>}, {}, {transform_indices = @transform_3, window_bounds = array<i64: 8, 32>}]} {
    %c8_i32 = arith.constant 8 : i32
    %0 = arith.muli %arg0, %c8_i32 : i32
    %c0_i32 = arith.constant 0 : i32
    %c8_i32_0 = arith.constant 8 : i32
    %1 = arith.addi %c0_i32, %c8_i32_0 : i32
    %c1_i32 = arith.constant 1 : i32
    scf.for %arg8 = %c0_i32 to %1 step %c1_i32  : i32 {
      %c1_i32_10 = arith.constant 1 : i32
      %23 = arith.muli %arg8, %c1_i32_10 : i32
      %c0_i32_11 = arith.constant 0 : i32
      %24 = arith.addi %c0_i32_11, %23 : i32
      %25 = arith.addi %0, %24 : i32
      %26 = arith.index_cast %25 : i32 to index
      %27 = memref.load %arg1[%26] : memref<16xi32, #tpu.memory_space<smem>>
      %c0_i32_12 = arith.constant 0 : i32
      %28 = tpu.memref_slice %arg5[%27, %c0_i32_12] : memref<32x32xf32, #tpu.memory_space<any>> -> memref<1x32xf32, #tpu.memory_space<any>>
      %c0_i32_13 = arith.constant 0 : i32
      %29 = tpu.memref_slice %arg6[%24, %c0_i32_13] : memref<8x32xf32, #tpu.memory_space<vmem>> -> memref<1x32xf32, #tpu.memory_space<vmem>>
      %30 = tpu.memref_slice %arg7[%24] : memref<8x!tpu.dma_semaphore, #tpu.memory_space<semaphore_mem>> -> memref<1x!tpu.dma_semaphore, #tpu.memory_space<semaphore_mem>>
      %31 = tpu.memref_squeeze %30 : memref<1x!tpu.dma_semaphore, #tpu.memory_space<semaphore_mem>> -> memref<!tpu.dma_semaphore, #tpu.memory_space<semaphore_mem>>
      tpu.enqueue_dma source(%28 : memref<1x32xf32, #tpu.memory_space<any>>) target(%29 : memref<1x32xf32, #tpu.memory_space<vmem>>) target_semaphore(%31 : memref<!tpu.dma_semaphore, #tpu.memory_space<semaphore_mem>>)
    }
    %c8_i32_1 = arith.constant 8 : i32
    %c0_i32_2 = arith.constant 0 : i32
    %c8_i32_3 = arith.constant 8 : i32
    %2 = arith.addi %c0_i32_2, %c8_i32_3 : i32
    %c1_i32_4 = arith.constant 1 : i32
    scf.for %arg8 = %c0_i32_2 to %2 step %c1_i32_4  : i32 {
      %c1_i32_10 = arith.constant 1 : i32
      %23 = arith.muli %arg8, %c1_i32_10 : i32
      %c0_i32_11 = arith.constant 0 : i32
      %24 = arith.addi %c0_i32_11, %23 : i32
      %c8_i32_12 = arith.constant 8 : i32
      %c0_i32_13 = arith.constant 0 : i32
      %25 = arith.cmpi eq, %c8_i32_12, %c0_i32_13 : i32
      %c1_i32_14 = arith.constant 1 : i32
      %26 = arith.select %25, %c1_i32_14, %c8_i32_12 : i32
      %27 = arith.remsi %24, %26 : i32
      %c0_i32_15 = arith.constant 0 : i32
      %28 = arith.cmpi ne, %27, %c0_i32_15 : i32
      %c0_i32_16 = arith.constant 0 : i32
      %29 = arith.cmpi slt, %27, %c0_i32_16 : i32
      %c0_i32_17 = arith.constant 0 : i32
      %30 = arith.cmpi slt, %26, %c0_i32_17 : i32
      %31 = arith.xori %29, %30 : i1
      %32 = arith.andi %31, %28 : i1
      %33 = arith.addi %27, %26 : i32
      %34 = arith.select %32, %33, %27 : i32
      %35 = arith.addi %0, %24 : i32
      %36 = arith.index_cast %35 : i32 to index
      %37 = memref.load %arg1[%36] : memref<16xi32, #tpu.memory_space<smem>>
      %c0_i32_18 = arith.constant 0 : i32
      %38 = tpu.memref_slice %arg5[%37, %c0_i32_18] : memref<32x32xf32, #tpu.memory_space<any>> -> memref<1x32xf32, #tpu.memory_space<any>>
      %c0_i32_19 = arith.constant 0 : i32
      %39 = tpu.memref_slice %arg6[%24, %c0_i32_19] : memref<8x32xf32, #tpu.memory_space<vmem>> -> memref<1x32xf32, #tpu.memory_space<vmem>>
      %40 = tpu.memref_slice %arg7[%34] : memref<8x!tpu.dma_semaphore, #tpu.memory_space<semaphore_mem>> -> memref<1x!tpu.dma_semaphore, #tpu.memory_space<semaphore_mem>>
      %41 = tpu.memref_squeeze %40 : memref<1x!tpu.dma_semaphore, #tpu.memory_space<semaphore_mem>> -> memref<!tpu.dma_semaphore, #tpu.memory_space<semaphore_mem>>
      tpu.wait_dma2 semaphore(%41 : memref<!tpu.dma_semaphore, #tpu.memory_space<semaphore_mem>>) src(%38 : memref<1x32xf32, #tpu.memory_space<any>>) dst(%39 : memref<1x32xf32, #tpu.memory_space<vmem>>)
      %c8_i32_20 = arith.constant 8 : i32
      %42 = arith.addi %24, %c8_i32_20 : i32
      %c8_i32_21 = arith.constant 8 : i32
      %43 = arith.cmpi slt, %42, %c8_i32_21 : i32
      %44 = arith.extui %43 : i1 to i32
      %c0_i32_22 = arith.constant 0 : i32
      %45 = arith.cmpi ne, %44, %c0_i32_22 : i32
      scf.if %45 {
        %c8_i32_23 = arith.constant 8 : i32
        %46 = arith.addi %24, %c8_i32_23 : i32
        %47 = arith.addi %0, %46 : i32
        %48 = arith.index_cast %47 : i32 to index
        %49 = memref.load %arg1[%48] : memref<16xi32, #tpu.memory_space<smem>>
        %c0_i32_24 = arith.constant 0 : i32
        %50 = tpu.memref_slice %arg5[%49, %c0_i32_24] : memref<32x32xf32, #tpu.memory_space<any>> -> memref<1x32xf32, #tpu.memory_space<any>>
        %c0_i32_25 = arith.constant 0 : i32
        %51 = tpu.memref_slice %arg6[%46, %c0_i32_25] : memref<8x32xf32, #tpu.memory_space<vmem>> -> memref<1x32xf32, #tpu.memory_space<vmem>>
        %52 = tpu.memref_slice %arg7[%34] : memref<8x!tpu.dma_semaphore, #tpu.memory_space<semaphore_mem>> -> memref<1x!tpu.dma_semaphore, #tpu.memory_space<semaphore_mem>>
        %53 = tpu.memref_squeeze %52 : memref<1x!tpu.dma_semaphore, #tpu.memory_space<semaphore_mem>> -> memref<!tpu.dma_semaphore, #tpu.memory_space<semaphore_mem>>
        tpu.enqueue_dma source(%50 : memref<1x32xf32, #tpu.memory_space<any>>) target(%51 : memref<1x32xf32, #tpu.memory_space<vmem>>) target_semaphore(%53 : memref<!tpu.dma_semaphore, #tpu.memory_space<semaphore_mem>>)
      } else {
      }
    }
    %c8_i32_5 = arith.constant 8 : i32
    %c0 = arith.constant 0 : index
    %c0_6 = arith.constant 0 : index
    %3 = vector.load %arg3[%c0, %c0_6] : memref<8x1xi32, #tpu.memory_space<vmem>>, vector<8x1xi32>
    %c0_7 = arith.constant 0 : index
    %4 = memref.load %arg2[%c0_7] : memref<3xi32, #tpu.memory_space<smem>>
    %5 = vector.broadcast %4 : i32 to vector<8x1xi32>
    %6 = arith.cmpi eq, %3, %5 : vector<8x1xi32>
    %c1 = arith.constant 1 : index
    %7 = memref.load %arg2[%c1] : memref<3xi32, #tpu.memory_space<smem>>
    %8 = vector.broadcast %7 : i32 to vector<8x1xi32>
    %9 = arith.cmpi eq, %3, %8 : vector<8x1xi32>
    %10 = arith.ori %6, %9 : vector<8x1xi1>
    %c2 = arith.constant 2 : index
    %11 = memref.load %arg2[%c2] : memref<3xi32, #tpu.memory_space<smem>>
    %12 = vector.broadcast %11 : i32 to vector<8x1xi32>
    %13 = arith.cmpi eq, %3, %12 : vector<8x1xi32>
    %14 = arith.ori %10, %13 : vector<8x1xi1>
    %15 = arith.extui %14 : vector<8x1xi1> to vector<8x1xi32>
    %16 = vector.shape_cast %15 : vector<8x1xi32> to vector<1x8x1xi32>
    %cst = arith.constant dense<0> : vector<1xi32>
    %17 = vector.multi_reduction <add>, %16, %cst [1, 2] : vector<1x8x1xi32> to vector<1xi32>
    %18 = vector.shape_cast %17 : vector<1xi32> to vector<1x1x1xi32>
    %19 = vector.extract %18[0, 0, 0] : i32 from vector<1x1x1xi32>
    %c0_i32_8 = arith.constant 0 : i32
    %20 = arith.cmpi sgt, %19, %c0_i32_8 : i32
    %21 = arith.extui %20 : i1 to i32
    %c0_i32_9 = arith.constant 0 : i32
    %22 = arith.cmpi ne, %21, %c0_i32_9 : i32
    scf.if %22 {
      %c0_10 = arith.constant 0 : index
      %c0_11 = arith.constant 0 : index
      %23 = vector.load %arg6[%c0_10, %c0_11] : memref<8x32xf32, #tpu.memory_space<vmem>>, vector<8x32xf32>
      %c0_12 = arith.constant 0 : index
      %24 = memref.load %arg2[%c0_12] : memref<3xi32, #tpu.memory_space<smem>>
      %25 = vector.broadcast %24 : i32 to vector<8x1xi32>
      %26 = arith.cmpi eq, %3, %25 : vector<8x1xi32>
      %c0_13 = arith.constant 0 : index
      %c0_14 = arith.constant 0 : index
      %27 = vector.load %arg4[%c0_13, %c0_14] : memref<3x32xf32, #tpu.memory_space<vmem>>, vector<1x32xf32>
      %28 = vector.shape_cast %27 : vector<1x32xf32> to vector<32xf32>
      %29 = vector.shape_cast %28 : vector<32xf32> to vector<1x32xf32>
      %30 = vector.shape_cast %26 : vector<8x1xi1> to vector<8x1xi1>
      %31 = vector.broadcast %30 : vector<8x1xi1> to vector<8x32xi1>
      %32 = vector.shape_cast %29 : vector<1x32xf32> to vector<1x32xf32>
      %33 = vector.broadcast %32 : vector<1x32xf32> to vector<8x32xf32>
      %34 = arith.select %31, %33, %23 : vector<8x32xi1>, vector<8x32xf32>
      %c1_15 = arith.constant 1 : index
      %35 = memref.load %arg2[%c1_15] : memref<3xi32, #tpu.memory_space<smem>>
      %36 = vector.broadcast %35 : i32 to vector<8x1xi32>
      %37 = arith.cmpi eq, %3, %36 : vector<8x1xi32>
      %c1_16 = arith.constant 1 : index
      %c0_17 = arith.constant 0 : index
      %38 = vector.load %arg4[%c1_16, %c0_17] : memref<3x32xf32, #tpu.memory_space<vmem>>, vector<1x32xf32>
      %39 = vector.shape_cast %38 : vector<1x32xf32> to vector<32xf32>
      %40 = vector.shape_cast %39 : vector<32xf32> to vector<1x32xf32>
      %41 = vector.shape_cast %37 : vector<8x1xi1> to vector<8x1xi1>
      %42 = vector.broadcast %41 : vector<8x1xi1> to vector<8x32xi1>
      %43 = vector.shape_cast %40 : vector<1x32xf32> to vector<1x32xf32>
      %44 = vector.broadcast %43 : vector<1x32xf32> to vector<8x32xf32>
      %45 = arith.select %42, %44, %34 : vector<8x32xi1>, vector<8x32xf32>
      %c2_18 = arith.constant 2 : index
      %46 = memref.load %arg2[%c2_18] : memref<3xi32, #tpu.memory_space<smem>>
      %47 = vector.broadcast %46 : i32 to vector<8x1xi32>
      %48 = arith.cmpi eq, %3, %47 : vector<8x1xi32>
      %c2_19 = arith.constant 2 : index
      %c0_20 = arith.constant 0 : index
      %49 = vector.load %arg4[%c2_19, %c0_20] : memref<3x32xf32, #tpu.memory_space<vmem>>, vector<1x32xf32>
      %50 = vector.shape_cast %49 : vector<1x32xf32> to vector<32xf32>
      %51 = vector.shape_cast %50 : vector<32xf32> to vector<1x32xf32>
      %52 = vector.shape_cast %48 : vector<8x1xi1> to vector<8x1xi1>
      %53 = vector.broadcast %52 : vector<8x1xi1> to vector<8x32xi1>
      %54 = vector.shape_cast %51 : vector<1x32xf32> to vector<1x32xf32>
      %55 = vector.broadcast %54 : vector<1x32xf32> to vector<8x32xf32>
      %56 = arith.select %53, %55, %45 : vector<8x32xi1>, vector<8x32xf32>
      %c0_21 = arith.constant 0 : index
      %c0_22 = arith.constant 0 : index
      %57 = vector.load %arg6[%c0_21, %c0_22] : memref<8x32xf32, #tpu.memory_space<vmem>>, vector<8x32xf32>
      tpu.vector_store %arg6[%c0_21, %c0_22], %56 {strides = array<i32>} : memref<8x32xf32, #tpu.memory_space<vmem>>, vector<8x32xf32>,
    } else {
    }
    return
  }
  func.func @transform_0(%arg0: i32, %arg1: memref<16xi32, #tpu.memory_space<smem>>, %arg2: memref<3xi32, #tpu.memory_space<smem>>) -> (i32, i32) {
    %c0_i32 = arith.constant 0 : i32
    %c0_i32_0 = arith.constant 0 : i32
    return %arg0, %c0_i32 : i32, i32
  }
  func.func @transform_1(%arg0: i32, %arg1: memref<16xi32, #tpu.memory_space<smem>>, %arg2: memref<3xi32, #tpu.memory_space<smem>>) -> (i32, i32) {
    %c0_i32 = arith.constant 0 : i32
    %c0_i32_0 = arith.constant 0 : i32
    %c0_i32_1 = arith.constant 0 : i32
    return %c0_i32, %c0_i32_0 : i32, i32
  }
  func.func @transform_3(%arg0: i32, %arg1: memref<16xi32, #tpu.memory_space<smem>>, %arg2: memref<3xi32, #tpu.memory_space<smem>>) -> (i32, i32) {
    %c0_i32 = arith.constant 0 : i32
    %c0_i32_0 = arith.constant 0 : i32
    return %arg0, %c0_i32 : i32, i32
  }
}

</mosaic_0001>

<llo_original>
// kernel: arp_injector.1
$region0: #{arp_injector.1}
  #allocation0 [shape = 'u32[]', space=smem, size = 0x4, offset = 0x4, fixed_abs, tag = 'smem constant byte address 0x4 - core index']
  #allocation1 [shape = 'u32[144,128]{1,0:T(1,128)}', space=vmem, size = 0x12000, scoped, tag = 'internal scratch']
  #allocation2 [shape = 's32[8]{0}', space=sflag, size = 0x20, scoped, tag = 'scratch operand']
  #allocation3 [shape = 's32[1]{0}', space=sflag, size = 0x4, scoped, tag = 'scoped memory for arp_injector.1']
  #allocation4 [shape = 'u8[512]{0}', space=smem, size = 0x200, scoped, tag = 'prefetched SMEM operand 0']
  #allocation5 [shape = 'u8[512]{0}', space=smem, size = 0x200, scoped, tag = 'prefetched SMEM operand 1']
  #allocation8 [shape = 's32[]', space=sflag, size = 0x4, offset = 0, fixed_abs, tag = 'sflag constant byte address 0x0 - dummy sync flag']
  #allocation9 [shape = 's32[]', space=sflag, size = 0x4, offset = 0, fixed_abs, tag = 'sflag constant byte address 0x0 - dummy sync flag']
  #allocation10 [shape = 'u32[]', space=smem, size = 0x4, offset = 0x44, fixed_abs, tag = 'smem constant byte address 0x44 - assertion arg 0']
  #allocation11 [shape = 'u32[]', space=smem, size = 0x4, offset = 0x48, fixed_abs, tag = 'smem constant byte address 0x48 - assertion arg 1']
  #allocation12 [shape = 's32[]', space=sflag, size = 0x4, offset = 0, fixed_abs, tag = 'sflag constant byte address 0x0 - dummy sync flag']
  #allocation13 [shape = 's32[]', space=sflag, size = 0x4, offset = 0, fixed_abs, tag = 'sflag constant byte address 0x0 - dummy sync flag']
  %s0 = inlined_call_operand.vmem [shape: s32[16], index: 0, kind: input, shape index: {}]
  %s1 = inlined_call_operand.vmem [shape: s32[3], index: 1, kind: input, shape index: {}]
  %s2 = inlined_call_operand.vmem [shape: s32[16,1], index: 2, kind: input, shape index: {}]
  %s3 = inlined_call_operand.vmem [shape: f32[3,32], index: 3, kind: input, shape index: {}]
  %s4 = inlined_call_operand.hbm [shape: f32[32,32], index: 4, kind: input, shape index: {}]
  %s5 = inlined_call_operand.hbm [shape: f32[16,32], index: 5, kind: output, shape index: {}]
  %s6 = sld [smem:[#allocation0]]
  $region71: #{arp_injector.1} parent=0
    _
  %s8 = ssub.s32 1, %s6
  %s9 = scalar_select 0, %s8, %s6
  %s10 = sshll.u32 %s0, 4
  %s11 = int_to_ptr.vmem [resolvable:$true] %s10
  %13 = dma.vmem_to_smem %s11, 16, [#allocation4], [#allocation3]
  %s14 = sshll.u32 %s1, 4
  %s15 = int_to_ptr.vmem [resolvable:$true] %s14
  %17 = dma.vmem_to_smem %s15, 16, [#allocation5], [#allocation3]
  %18 = dma.done [#allocation3], 32
  %19 = sfence
  $region1: #{arp_injector.1} parent=0
    #allocation6 [shape = 'u8[8192]{0}', space=vmem, size = 0x2000, scoped, tag = 'output window, operand 0']
    #allocation7 [shape = 's32[2]{0}', space=sflag, size = 0x8, scoped, tag = 'scoped memory for arp_injector.1']
    %20 = vsyncpa [#allocation7], 0
    %s21 = scalar_lea.sflag [#allocation7], 1
    %22 = vsyncpa %s21, 0
    loop: start=0, step=1, limit=4
    $region2: #{arp_injector.1} parent=1 // loop_pre_header
      _
    $region3: #{arp_injector.1} parent=1 // loop_header
      %s24 = sphi 0, %s28
      %p25 = scmp.ge.s32.totalorder %s24, 4
      %s34 = sphi 0, %s36
      %s37 = sphi 0, %s34
      %s38 = sphi 0, %s37
      %s54 = sphi 0, %s38
      %s58 = sphi 0, %s58
      %s60 = sphi 0, %s58
      %s61 = sphi 0, %s60
      %s75 = sphi 0, %s61
      %s81 = sphi 0, %s83
      %s84 = sphi 0, %s81
      %s85 = sphi 0, %s84
      %s101 = sphi 0, %s85
    $region4: #{arp_injector.1} parent=1 // loop_header_branch
      %27 = sbr.rel (%p25) target = $region8
    $region5: #{arp_injector.1} parent=1 // loop_body
      %s29 = ssub.s32 %s24, 1
      %s30 = ssub.s32 %s24, 2
      %s31 = sadd.s32 %s24, 1
      %s32 = ssub.s32 %s24, %s31
      %p33 = scmp.eq.s32.totalorder %s32, 0
      %s35 = sadd.s32 %s34, 1
      %s36 = scalar_select %p33, %s34, %s35
      %p39 = pneg %p33
      %p40 = scmp.eq.s32.totalorder %s24, 1
      %p41 = por %p39, %p40
      %p42 = scmp.ne.s32.totalorder %s34, %s37
      %p43 = scmp.eq.s32.totalorder %s24, 0
      %p44 = por %p42, %p43
      %p45 = scmp.ne.s32.totalorder %s34, %s37
      %p46 = scmp.eq.s32.totalorder %s29, 1
      %p47 = por %p45, %p46
      %p48 = scmp.ne.s32.totalorder %s37, %s38
      %p49 = scmp.eq.s32.totalorder %s29, 0
      %p50 = por %p48, %p49
      %p51 = scmp.ne.s32.totalorder %s37, %s38
      %p52 = scmp.eq.s32.totalorder %s30, 1
      %p53 = por %p51, %p52
      %p55 = scmp.ne.s32.totalorder %s38, %s54
      %p56 = scmp.eq.s32.totalorder %s30, 0
      %p57 = por %p55, %p56
      %s59 = sadd.s32 %s58, 1
      %p62 = scmp.eq.s32.totalorder %s24, 1
      %p63 = scmp.ne.s32.totalorder %s58, %s60
      %p64 = scmp.eq.s32.totalorder %s24, 0
      %p65 = por %p63, %p64
      %p66 = scmp.ne.s32.totalorder %s58, %s60
      %p67 = scmp.eq.s32.totalorder %s29, 1
      %p68 = por %p66, %p67
      %p69 = scmp.ne.s32.totalorder %s60, %s61
      %p70 = scmp.eq.s32.totalorder %s29, 0
      %p71 = por %p69, %p70
      %p72 = scmp.ne.s32.totalorder %s60, %s61
      %p73 = scmp.eq.s32.totalorder %s30, 1
      %p74 = por %p72, %p73
      %p76 = scmp.ne.s32.totalorder %s61, %s75
      %p77 = scmp.eq.s32.totalorder %s30, 0
      %p78 = por %p76, %p77
      %s79 = ssub.s32 %s24, %s31
      %p80 = scmp.eq.s32.totalorder %s79, 0
      %s82 = sadd.s32 %s81, 1
      %s83 = scalar_select %p80, %s81, %s82
      %p86 = pneg %p80
      %p87 = scmp.eq.s32.totalorder %s24, 1
      %p88 = por %p86, %p87
      %p89 = scmp.ne.s32.totalorder %s81, %s84
      %p90 = scmp.eq.s32.totalorder %s24, 0
      %p91 = por %p89, %p90
      %p92 = scmp.ne.s32.totalorder %s81, %s84
      %p93 = scmp.eq.s32.totalorder %s29, 1
      %p94 = por %p92, %p93
      %p95 = scmp.ne.s32.totalorder %s84, %s85
      %p96 = scmp.eq.s32.totalorder %s29, 0
      %p97 = por %p95, %p96
      %p98 = scmp.ne.s32.totalorder %s84, %s85
      %p99 = scmp.eq.s32.totalorder %s30, 1
      %p100 = por %p98, %p99
      %p102 = scmp.ne.s32.totalorder %s85, %s101
      %p103 = scmp.eq.s32.totalorder %s30, 0
      %p104 = por %p102, %p103
      %p105 = scmp.le.s32.totalorder 1, %s24
      %p106 = scmp.lt.s32.totalorder %s24, 3
      %p107 = pnand %p105, %p106
      %p108 = pneg %p107
      // Predicated region
      $region9: #{arp_injector.1} parent=5 // pred_check
        _
      $region10: #{arp_injector.1} parent=5 // pred_check_branch
        %110 = sbr.rel (%p107) target = $region12
      $region11: #{arp_injector.1} parent=5 // pred_region
        %s111 = ssub.s32 %s24, 1
        // Predicated region
        $region13: #{arp_injector.1} parent=11 // pred_check
          %p112 = pneg %p71
        $region14: #{arp_injector.1} parent=11 // pred_check_branch
          %114 = sbr.rel (%p112) target = $region16
        $region15: #{arp_injector.1} parent=11 // pred_region
          _
        $region16: #{arp_injector.1} parent=11 // pred_fallthru
          _
      $region12: #{arp_injector.1} parent=5 // pred_fallthru
        _
      %p115 = scmp.lt.s32.totalorder %s24, 2
      // Predicated region
      $region17: #{arp_injector.1} parent=5 // pred_check
        %p116 = pneg %p115
      $region18: #{arp_injector.1} parent=5 // pred_check_branch
        %118 = sbr.rel (%p116) target = $region20
      $region19: #{arp_injector.1} parent=5 // pred_region
        // Predicated region
        $region21: #{arp_injector.1} parent=19 // pred_check
          %p119 = pneg %p44
        $region22: #{arp_injector.1} parent=19 // pred_check_branch
          %121 = sbr.rel (%p119) target = $region24
        $region23: #{arp_injector.1} parent=19 // pred_region
          %p122 = scmp.lt.s32.totalorder %s24, 1
          %s123 = scalar_select %p122, %s24, 1
          %s124 = smul.addr %s123, 8
          %s125 = scalar_lea.vmem %s2, %s124
        $region24: #{arp_injector.1} parent=19 // pred_fallthru
          _
      $region20: #{arp_injector.1} parent=5 // pred_fallthru
        _
      %p126 = scmp.le.s32.totalorder 1, %s24
      %p127 = scmp.lt.s32.totalorder %s24, 3
      %p128 = pnand %p126, %p127
      %p129 = pneg %p128
      // Predicated region
      $region25: #{arp_injector.1} parent=5 // pred_check
        _
      $region26: #{arp_injector.1} parent=5 // pred_check_branch
        %131 = sbr.rel (%p128) target = $region28
      $region27: #{arp_injector.1} parent=5 // pred_region
        %s132 = ssub.s32 %s24, 1
        %p133 = scmp.lt.s32.totalorder %s29, 1
        %s134 = scalar_select %p133, %s29, 1
        %s135 = smul.addr %s134, 8
        %s136 = scalar_lea.vmem %s2, %s135
        %p137 = pneg %p50
        %p138 = pneg %p47
        %p139 = pneg %p71
        %p140 = pneg %p68
        %p141 = pneg %p97
        %p142 = pneg %p94
        %s143 = sand.u32 %s84, 1
        %s144 = scalar_lea.sflag [#allocation7], %s143
        %s145 = sand.u32 %s84, 1
        %s146 = smul.addr %s145, 8
        %s147 = scalar_lea.vmem [#allocation6], %s146
        %p148 = scmp.lt.s32.totalorder %s29, 1
        %s149 = scalar_select %p148, %s29, 1
        %s150 = smul.addr %s149, 8
        %s151 = scalar_lea.vmem %s2, %s150
        %s152 = smul.u32 %s29, 8
        loop: start=0, step=1, limit=8
        $region29: #{arp_injector.1} parent=27 // loop_pre_header
          _
        $region30: #{arp_injector.1} parent=27 // loop_header
          %s154 = sphi 0, %s158
          %p155 = scmp.ge.s32.totalorder %s154, 8
        $region31: #{arp_injector.1} parent=27 // loop_header_branch
          %157 = sbr.rel (%p155) target = $region35
        $region32: #{arp_injector.1} parent=27 // loop_body
          %s159 = sadd.s32 %s152, %s154
          %s160 = sld [smem:[#allocation4 + %s159]]
          %s161 = smul.addr %s160, 16
          %s162 = scalar_lea.hbm %s4, %s161
          %s163 = scalar_lea.vmem %s147, %s154 [#allocation6]
          %s164 = scalar_lea.sflag [#allocation2], %s154
          // Predicated region
          $region36: #{arp_injector.1} parent=32 // pred_check
            _
          $region37: #{arp_injector.1} parent=32 // pred_check_branch
            %166 = sbr.rel target = $region39
          $region38: #{arp_injector.1} parent=32 // pred_region
            %167 = sst [smem:[#allocation10]] [#allocation9]
            %168 = sst [smem:[#allocation11]] [#allocation8]
          $region39: #{arp_injector.1} parent=32 // pred_fallthru
            _
          %170 = shalt.err (0)
          %s172 = sshll.u32 %s163, 4
          %s173 = int_to_ptr.vmem [resolvable:$true] %s172
          %175 = dma.hbm_to_vmem [thread:$0]  %s162, 16, %s173, %s164
        $region33: #{arp_injector.1} parent=27 // loop_footer
          %s158 = sadd.s32 1, %s154
        $region34: #{arp_injector.1} parent=27 // loop_footer_branch
          %153 = sbr.rel target = $region30
        $region35: #{arp_injector.1} parent=27 // loop_exit
          _
        loop: start=0, step=1, limit=8
        $region40: #{arp_injector.1} parent=27 // loop_pre_header
          _
        $region41: #{arp_injector.1} parent=27 // loop_header
          %s177 = sphi 0, %s181
          %p178 = scmp.ge.s32.totalorder %s177, 8
        $region42: #{arp_injector.1} parent=27 // loop_header_branch
          %180 = sbr.rel (%p178) target = $region46
        $region43: #{arp_injector.1} parent=27 // loop_body
          %p182 = scmp.lt.s32.totalorder %s177, 0
          %s183 = ssub.s32 0, %s177
          %s184 = scalar_select %p182, %s183, %s177
          %s185 = sand.u32 %s184, 7
          %s186 = ssub.s32 0, %s185
          %s187 = scalar_select %p182, %s186, %s185
          %p188 = scmp.ne.s32.totalorder %s187, 0
          %p189 = scmp.lt.s32.totalorder %s187, 0
          %p190 = pnand %p189, %p188
          %p191 = pneg %p190
          %s192 = sadd.s32 %s187, 8
          %s193 = scalar_select %p191, %s192, %s187
          %s194 = sadd.s32 %s152, %s177
          %s195 = sld [smem:[#allocation4 + %s194]]
          %s196 = scalar_lea.sflag [#allocation2], %s193
          %s197 = smul.u32 1, 1
          %s198 = sshll.u32 %s197, 4
          %199 = dma.done %s196, %s198
          %s200 = sadd.s32 %s177, 8
          %p201 = scmp.lt.s32.totalorder %s200, 8
          // Predicated region
          $region47: #{arp_injector.1} parent=43 // pred_check
            %p202 = pneg %p201
          $region48: #{arp_injector.1} parent=43 // pred_check_branch
            %204 = sbr.rel (%p202) target = $region50
          $region49: #{arp_injector.1} parent=43 // pred_region
            %s205 = sadd.s32 %s152, %s200
            %s206 = sld [smem:[#allocation4 + %s205]]
            %s207 = smul.addr %s206, 16
            %s208 = scalar_lea.hbm %s4, %s207
            %s209 = scalar_lea.vmem %s147, %s200 [#allocation6]
            // Predicated region
            $region51: #{arp_injector.1} parent=49 // pred_check
              _
            $region52: #{arp_injector.1} parent=49 // pred_check_branch
              %211 = sbr.rel target = $region54
            $region53: #{arp_injector.1} parent=49 // pred_region
              %212 = sst [smem:[#allocation10]] [#allocation13]
              %213 = sst [smem:[#allocation11]] [#allocation12]
            $region54: #{arp_injector.1} parent=49 // pred_fallthru
              _
            %215 = shalt.err (0)
            %s217 = sshll.u32 %s209, 4
            %s218 = int_to_ptr.vmem [resolvable:$true] %s217
            %220 = dma.hbm_to_vmem [thread:$0]  %s208, 16, %s218, %s196
          $region50: #{arp_injector.1} parent=43 // pred_fallthru
            _
        $region44: #{arp_injector.1} parent=27 // loop_footer
          %s181 = sadd.s32 1, %s177
        $region45: #{arp_injector.1} parent=27 // loop_footer_branch
          %176 = sbr.rel target = $region41
        $region46: #{arp_injector.1} parent=27 // loop_exit
          _
        %v221 = vld [vmem:[%s151] sm:$0xff]
        %s222 = sld [smem:[#allocation5]]
        %v223 = vstv %s222
        %vm224 = vcmp.eq.s32.totalorder %v221, %v223
        %s225 = sld [smem:[#allocation5 + $0x1]]
        %v226 = vstv %s225
        %vm227 = vcmp.eq.s32.totalorder %v221, %v226
        %vm228 = vmor %vm224, %vm227
        %s229 = sld [smem:[#allocation5 + $0x2]]
        %v230 = vstv %s229
        %vm231 = vcmp.eq.s32.totalorder %v221, %v230
        %vm232 = vmor %vm228, %vm231
        %v233 = vsel %vm232, 1, 0
        %vm234 = vcmask 7168
        %v235 = vsel %vm234, %v233, 0
        %v236 = vand.u32 %v235, 65535
        %v237 = vshrl.u32 %v235, 16
        %v238 = vcvt.s32.f32 %v236
        %v239 = vcvt.s32.f32 %v237
        %240 = vadd.xlane.f32.xlu0 %v238
        %v241 = vpop.xlane.xlu0 %240
        %242 = vadd.xlane.f32.xlu0 %v239
        %v243 = vpop.xlane.xlu0 %242
        %v244 = vcvt.f32.s32 %v241
        %v245 = vcvt.f32.s32 %v243
        %v246 = vshll.u32 %v245, 16
        %v247 = vadd.s32 %v246, %v244
        %v248 = vrot.slane %v247, 4
        %v249 = vadd.s32 %v247, %v248
        %v250 = vrot.slane %v249, 2
        %v251 = vadd.s32 %v249, %v250
        %v252 = vrot.slane %v251, 1
        %v253 = vadd.s32 %v251, %v252
        %s254 = vtos %v253
        %p255 = scmp.gt.s32.totalorder %s254, 0
        // Predicated region
        $region55: #{arp_injector.1} parent=27 // pred_check
          %p256 = pneg %p255
        $region56: #{arp_injector.1} parent=27 // pred_check_branch
          %258 = sbr.rel (%p256) target = $region58
        $region57: #{arp_injector.1} parent=27 // pred_region
          %v259 = vld [vmem:[%s147] sm:$0xff]
          %s260 = sld [smem:[#allocation5]]
          %v261 = vstv %s260
          %vm262 = vcmp.eq.s32.totalorder %v221, %v261
          %v263 = vld [vmem:[%s3] sm:$0x1]
          %v264 = vsel %vm262, 1, 0
          %265 = vset.pattern.permute.xlu0 0
          %266 = vperm.xlu0 %265, %v264
          %v267 = vpop.permute.xlu0 %266
          %vm268 = vcmp.eq.s32.totalorder %v267, 1
          %v269 = vlaneseq
          %v270 = vshrl.u32 %v269, 7
          %v271 = vsub.s32 0, %v270
          %v272 = vrot.slane %v263, %v271
          %v273 = vsel %vm268, %v272, %v259
          %s274 = sld [smem:[#allocation5 + $0x1]]
          %v275 = vstv %s274
          %vm276 = vcmp.eq.s32.totalorder %v221, %v275
          %v277 = vld [vmem:[%s3 + $0x1] sm:$0x1]
          %v278 = vsel %vm276, 1, 0
          %279 = vset.pattern.permute.xlu0 0
          %280 = vperm.xlu0 %279, %v278
          %v281 = vpop.permute.xlu0 %280
          %vm282 = vcmp.eq.s32.totalorder %v281, 1
          %v283 = vlaneseq
          %v284 = vshrl.u32 %v283, 7
          %v285 = vsub.s32 0, %v284
          %v286 = vrot.slane %v277, %v285
          %v287 = vsel %vm282, %v286, %v273
          %s288 = sld [smem:[#allocation5 + $0x2]]
          %v289 = vstv %s288
          %vm290 = vcmp.eq.s32.totalorder %v221, %v289
          %v291 = vld [vmem:[%s3 + $0x2] sm:$0x1]
          %v292 = vsel %vm290, 1, 0
          %293 = vset.pattern.permute.xlu0 0
          %294 = vperm.xlu0 %293, %v292
          %v295 = vpop.permute.xlu0 %294
          %vm296 = vcmp.eq.s32.totalorder %v295, 1
          %v297 = vlaneseq
          %v298 = vshrl.u32 %v297, 7
          %v299 = vsub.s32 0, %v298
          %v300 = vrot.slane %v291, %v299
          %v301 = vsel %vm296, %v300, %v287
          %vm302 = vcmask 261120
          %303 = vst.msk [vmem:[%s147] sm:$0xff] %vm302, %v301
        $region58: #{arp_injector.1} parent=27 // pred_fallthru
          _
        %s304 = sand.u32 %s84, 1
        %s305 = scalar_lea.sflag [#allocation7], %s304
        %s306 = sand.u32 %s84, 1
        %s307 = smul.addr %s306, 8
        %s308 = scalar_lea.vmem [#allocation6], %s307
        // Predicated region
        $region59: #{arp_injector.1} parent=27 // pred_check
          %p309 = pneg %p94
        $region60: #{arp_injector.1} parent=27 // pred_check_branch
          %311 = sbr.rel (%p309) target = $region62
        $region61: #{arp_injector.1} parent=27 // pred_region
          %s313 = ssub.s32 128, 128
          %314 = vsyncadd %s305, %s313
          %s315 = smul.addr %s29, 128
          %s316 = scalar_lea.hbm %s5, %s315
          %s318 = sshll.u32 %s308, 4
          %s319 = int_to_ptr.vmem [resolvable:$true] %s318
          %321 = dma.vmem_to_hbm [thread:$0]  %s319, 128, %s316, %s305
        $region62: #{arp_injector.1} parent=27 // pred_fallthru
          _
      $region28: #{arp_injector.1} parent=5 // pred_fallthru
        _
      %p322 = scmp.le.s32.totalorder 2, %s24
      // Predicated region
      $region63: #{arp_injector.1} parent=5 // pred_check
        %p323 = pneg %p322
      $region64: #{arp_injector.1} parent=5 // pred_check_branch
        %325 = sbr.rel (%p323) target = $region66
      $region65: #{arp_injector.1} parent=5 // pred_region
        %s326 = ssub.s32 %s24, 2
        // Predicated region
        $region67: #{arp_injector.1} parent=65 // pred_check
          %p327 = pneg %p100
        $region68: #{arp_injector.1} parent=65 // pred_check_branch
          %329 = sbr.rel (%p327) target = $region70
        $region69: #{arp_injector.1} parent=65 // pred_region
          %s330 = sand.u32 %s85, 1
          %s331 = scalar_lea.sflag [#allocation7], %s330
          %s332 = sand.u32 %s85, 1
          %s333 = smul.addr %s332, 8
          %s334 = scalar_lea.vmem [#allocation6], %s333
          %335 = dma.done %s331, 128
        $region70: #{arp_injector.1} parent=65 // pred_fallthru
          _
      $region66: #{arp_injector.1} parent=5 // pred_fallthru
        _
    $region6: #{arp_injector.1} parent=1 // loop_footer
      %s28 = sadd.s32 1, %s24
    $region7: #{arp_injector.1} parent=1 // loop_footer_branch
      %23 = sbr.rel target = $region3
    $region8: #{arp_injector.1} parent=1 // loop_exit
      _
    %336 = vsyncpa [#allocation7], 1
    %s337 = scalar_lea.sflag [#allocation7], 1
    %338 = vsyncpa %s337, 1
  %339 = vsyncmov [#allocation2]
  %s340 = vpop.sfrf %339
  %p341 = scmp.eq.s32.totalorder %s340, 0
  %p342 = pneg %p341
  %344 = shalt.err (%p342)
  %s345 = scalar_lea.sflag [#allocation2], 1
  %346 = vsyncmov %s345
  %s347 = vpop.sfrf %346
  %p348 = scmp.eq.s32.totalorder %s347, 0
  %p349 = pneg %p348
  %351 = shalt.err (%p349)
  %s352 = scalar_lea.sflag [#allocation2], 2
  %353 = vsyncmov %s352
  %s354 = vpop.sfrf %353
  %p355 = scmp.eq.s32.totalorder %s354, 0
  %p356 = pneg %p355
  %358 = shalt.err (%p356)
  %s359 = scalar_lea.sflag [#allocation2], 3
  %360 = vsyncmov %s359
  %s361 = vpop.sfrf %360
  %p362 = scmp.eq.s32.totalorder %s361, 0
  %p363 = pneg %p362
  %365 = shalt.err (%p363)
  %s366 = scalar_lea.sflag [#allocation2], 4
  %367 = vsyncmov %s366
  %s368 = vpop.sfrf %367
  %p369 = scmp.eq.s32.totalorder %s368, 0
  %p370 = pneg %p369
  %372 = shalt.err (%p370)
  %s373 = scalar_lea.sflag [#allocation2], 5
  %374 = vsyncmov %s373
  %s375 = vpop.sfrf %374
  %p376 = scmp.eq.s32.totalorder %s375, 0
  %p377 = pneg %p376
  %379 = shalt.err (%p377)
  %s380 = scalar_lea.sflag [#allocation2], 6
  %381 = vsyncmov %s380
  %s382 = vpop.sfrf %381
  %p383 = scmp.eq.s32.totalorder %s382, 0
  %p384 = pneg %p383
  %386 = shalt.err (%p384)
  %s387 = scalar_lea.sflag [#allocation2], 7
  %388 = vsyncmov %s387
  %s389 = vpop.sfrf %388
  %p390 = scmp.eq.s32.totalorder %s389, 0
  %p391 = pneg %p390
  %393 = shalt.err (%p391)

</llo_original>
